<compile_context>
chip_gen: v5e
topology: v5e:2x2
jax: 0.10.0
libtpu: 0.0.40
codegen_flags: <defaults>
</compile_context>

<pallas_src>
import jax
import jax.numpy as jnp
from jax import lax
from jax.experimental import pallas as pl
from jax.experimental.pallas import tpu as pltpu


def _bias_rmsnorm_silu_kernel(x_ref, b_ref, g_ref, o_ref):
    # x_ref: (1, C, TS)            conv output tile (spatial on lanes)
    # b_ref: (1, C, 128)           conv bias, lane-replicated
    # g_ref: (1, C, 128)           gamma * sqrt(C), lane-replicated
    # o_ref: (1, C, TS)
    b = b_ref[:, :, 0:1].astype(jnp.float32)                 # (1, C, 1)
    g = g_ref[:, :, 0:1].astype(jnp.float32)                 # (1, C, 1)
    x = x_ref[...].astype(jnp.float32) + b                   # fused bias add
    ss = jnp.sum(x * x, axis=1, keepdims=True)               # (1, 1, TS) channel reduce
    # F.normalize eps clamp: x / max(||x||, 1e-12) == x * rsqrt(max(ss, 1e-24))
    inv = lax.rsqrt(jnp.maximum(ss, 1e-24))                  # EUP rsqrt
    y = x * inv * g                                          # gamma pre-scaled by sqrt(C)
    sig = pl.reciprocal(1.0 + jnp.exp(-y), approx=True)      # sigmoid: EUP exp + EUP rcp
    o_ref[...] = (y * sig).astype(o_ref.dtype)


def _pick_spatial_tile(S, C, N, target_elems=1024 * 1024):
    """Largest lane-dense tile (multiple of 128, ~4 MiB f32) that keeps the
    double-buffered in+out footprint well under the 48 MiB VMEM budget, while
    guaranteeing >= 2 grid blocks when possible (v7x dual TensorCores)."""
    max_lanes = max(128, ((target_elems // max(C, 1)) // 128) * 128)
    ts = S if S <= max_lanes else max_lanes
    if N * pl.cdiv(S, ts) < 2 and S > 128:
        half = ((((S + 1) // 2) + 127) // 128) * 128
        ts = max(128, half)
    return ts


def bias_rmsnorm_silu_nchw(x, bias, gamma_scaled):
    """Fused (x + bias) -> RMSNorm(dim=1) -> SiLU on an NCHW tensor.

    bias:         (C,) conv bias.
    gamma_scaled: (C,) gamma already multiplied by sqrt(C).
    """
    N, C, H, W = x.shape
    S = H * W
    x3 = x.reshape(N, C, S)                               # free reshape
    b3 = jnp.broadcast_to(bias.reshape(1, C, 1).astype(jnp.float32), (1, C, 128))
    g3 = jnp.broadcast_to(gamma_scaled.reshape(1, C, 1).astype(jnp.float32), (1, C, 128))

    ts = _pick_spatial_tile(S, C, N)
    grid = (N, pl.cdiv(S, ts))                             # ragged last block is handled

    out3 = pl.pallas_call(
        _bias_rmsnorm_silu_kernel,
        out_shape=jax.ShapeDtypeStruct((N, C, S), x.dtype),
        grid_spec=pltpu.PrefetchScalarGridSpec(
            num_scalar_prefetch=0,
            grid=grid,
            in_specs=[
                pl.BlockSpec((1, C, ts), lambda n, s: (n, 0, s)),
                pl.BlockSpec((1, C, 128), lambda n, s: (0, 0, 0)),
                pl.BlockSpec((1, C, 128), lambda n, s: (0, 0, 0)),
            ],
            out_specs=pl.BlockSpec((1, C, ts), lambda n, s: (n, 0, s)),
        ),
        input_output_aliases={0: 0},                       # donate conv output buffer
        compiler_params=pltpu.CompilerParams(
            dimension_semantics=("parallel", "parallel"),
            vmem_limit_bytes=48 << 20,                     # headroom on v6e, safe on v7x
        ),
    )(x3, b3, g3)
    return out3.reshape(N, C, H, W)


@jax.jit
def block_forward(x, conv_w, conv_b, gamma):
    """Block.forward(x, scale_shift=None, enable_time=False) for NCHW input."""
    # PseudoConv3d spatial path: 3x3 Conv2d, padding 1 (XLA MXU conv). Bias is
    # folded into the Pallas kernel to guarantee it never becomes a separate
    # full HBM pass.
    # TODO(synk): scale_shift ((scale + 1) * x + shift) and the 5-D video /
    # temporal-conv path are not implemented; the default forward uses neither.
    y = lax.conv_general_dilated(
        x, conv_w,
        window_strides=(1, 1),
        padding=((1, 1), (1, 1)),
        dimension_numbers=("NCHW", "OIHW", "NCHW"),
    )
    c = gamma.shape[0]
    gamma_scaled = gamma.astype(jnp.float32) * (float(c) ** 0.5)
    return bias_rmsnorm_silu_nchw(y, conv_b, gamma_scaled)


def _reference_block(x, conv_w, conv_b, gamma):
    # Pure-JAX mirror of the PyTorch Block forward (conv -> RMSNorm -> SiLU).
    y = lax.conv_general_dilated(
        x, conv_w,
        window_strides=(1, 1),
        padding=((1, 1), (1, 1)),
        dimension_numbers=("NCHW", "OIHW", "NCHW"),
    )
    y = y + conv_b.reshape(1, -1, 1, 1)
    C = y.shape[1]
    norm = jnp.sqrt(jnp.sum(jnp.square(y.astype(jnp.float32)), axis=1, keepdims=True))
    n = y / jnp.maximum(norm, 1e-12) * (C ** 0.5) * gamma.reshape(1, C, 1, 1)
    return n * jax.nn.sigmoid(n)


if __name__ == "__main__":
    key = jax.random.PRNGKey(0)
    k1, k2, k3 = jax.random.split(key, 3)

    N, C_in, C_out, H, W = 2, 4, 4, 16, 16
    x = jax.random.normal(k1, (N, C_in, H, W), dtype=jnp.float32)
    conv_w = jax.random.normal(k2, (C_out, C_in, 3, 3), dtype=jnp.float32) * 0.2
    conv_b = jax.random.normal(k3, (C_out,), dtype=jnp.float32) * 0.1
    gamma = jnp.ones((C_out,), dtype=jnp.float32)   # nn.Parameter(torch.ones(chan))

    out = block_forward(x, conv_w, conv_b, gamma)
    out = jax.block_until_ready(out)

    ref = _reference_block(x, conv_w, conv_b, gamma)
    assert out.shape == (N, C_out, H, W)
    assert not jnp.any(jnp.isnan(out)), "NaN in kernel output"
    # Slightly relaxed tolerance: sigmoid uses the EUP approximate reciprocal.
    assert jnp.allclose(out, ref, atol=5e-3, rtol=5e-3), "mismatch vs reference"
    print("KERNEL_OK")
</pallas_src>

<mosaic_0001>
module attributes {stable_mosaic.version = 11 : i64} {
  func.func @_bias_rmsnorm_silu_kernel(%arg0: i32, %arg1: i32, %arg2: memref<1x4x256xf32, #tpu.memory_space<vmem>>, %arg3: memref<1x4x128xf32, #tpu.memory_space<vmem>>, %arg4: memref<1x4x128xf32, #tpu.memory_space<vmem>>, %arg5: memref<1x4x256xf32, #tpu.memory_space<vmem>>) attributes {dimension_semantics = [#tpu.dimension_semantics<parallel>, #tpu.dimension_semantics<parallel>], iteration_bounds = array<i64: 2, 1>, scalar_prefetch = 0 : i64, scratch_operands = 0 : i64, tpu.core_type = #tpu.core_type<tc>, window_params = [{transform_indices = @transform_0, window_bounds = array<i64: 1, 4, 256>}, {pipeline_mode = #tpu.pipeline_mode<synchronous>, transform_indices = @transform_1, window_bounds = array<i64: 1, 4, 128>}, {pipeline_mode = #tpu.pipeline_mode<synchronous>, transform_indices = @transform_2, window_bounds = array<i64: 1, 4, 128>}, {transform_indices = @transform_3, window_bounds = array<i64: 1, 4, 256>}]} {
    %c0 = arith.constant 0 : index
    %c0_0 = arith.constant 0 : index
    %c0_1 = arith.constant 0 : index
    %0 = vector.load %arg3[%c0, %c0_0, %c0_1] : memref<1x4x128xf32, #tpu.memory_space<vmem>>, vector<1x4x1xf32>
    %c0_2 = arith.constant 0 : index
    %c0_3 = arith.constant 0 : index
    %c0_4 = arith.constant 0 : index
    %1 = vector.load %arg4[%c0_2, %c0_3, %c0_4] : memref<1x4x128xf32, #tpu.memory_space<vmem>>, vector<1x4x1xf32>
    %c0_5 = arith.constant 0 : index
    %c0_6 = arith.constant 0 : index
    %c0_7 = arith.constant 0 : index
    %2 = vector.load %arg2[%c0_5, %c0_6, %c0_7] : memref<1x4x256xf32, #tpu.memory_space<vmem>>, vector<1x4x256xf32>
    %3 = vector.broadcast %0 : vector<1x4x1xf32> to vector<1x4x256xf32>
    %4 = arith.addf %2, %3 : vector<1x4x256xf32>
    %5 = arith.mulf %4, %4 : vector<1x4x256xf32>
    %cst = arith.constant dense<0.000000e+00> : vector<1x256xf32>
    %6 = vector.multi_reduction <add>, %5, %cst [1] : vector<1x4x256xf32> to vector<1x256xf32>
    %7 = vector.shape_cast %6 : vector<1x256xf32> to vector<1x1x256xf32>
    %cst_8 = arith.constant 1.000000e-24 : f32
    %8 = vector.broadcast %cst_8 : f32 to vector<1x1x256xf32>
    %9 = arith.maximumf %7, %8 : vector<1x1x256xf32>
    %10 = math.rsqrt %9 : vector<1x1x256xf32>
    %11 = vector.broadcast %10 : vector<1x1x256xf32> to vector<1x4x256xf32>
    %12 = arith.mulf %4, %11 : vector<1x4x256xf32>
    %13 = vector.broadcast %1 : vector<1x4x1xf32> to vector<1x4x256xf32>
    %14 = arith.mulf %12, %13 : vector<1x4x256xf32>
    %cst_9 = arith.constant 0.000000e+00 : f32
    %15 = vector.broadcast %cst_9 : f32 to vector<1x4x256xf32>
    %16 = arith.subf %15, %14 : vector<1x4x256xf32>
    %17 = math.exp %16 : vector<1x4x256xf32>
    %cst_10 = arith.constant 1.000000e+00 : f32
    %18 = vector.broadcast %cst_10 : f32 to vector<1x4x256xf32>
    %19 = arith.addf %18, %17 : vector<1x4x256xf32>
    %20 = tpu.reciprocal %19 {approx = true} : vector<1x4x256xf32> -> vector<1x4x256xf32>
    %21 = arith.mulf %14, %20 : vector<1x4x256xf32>
    %c0_11 = arith.constant 0 : index
    %c0_12 = arith.constant 0 : index
    %c0_13 = arith.constant 0 : index
    %22 = vector.load %arg5[%c0_11, %c0_12, %c0_13] : memref<1x4x256xf32, #tpu.memory_space<vmem>>, vector<1x4x256xf32>
    tpu.vector_store %arg5[%c0_11, %c0_12, %c0_13], %21 {strides = array<i32>} : memref<1x4x256xf32, #tpu.memory_space<vmem>>, vector<1x4x256xf32>,
    return
  }
  func.func @transform_0(%arg0: i32, %arg1: i32) -> (i32, i32, i32) {
    %c0_i32 = arith.constant 0 : i32
    %c0_i32_0 = arith.constant 0 : i32
    return %arg0, %c0_i32, %arg1 : i32, i32, i32
  }
  func.func @transform_1(%arg0: i32, %arg1: i32) -> (i32, i32, i32) {
    %c0_i32 = arith.constant 0 : i32
    %c0_i32_0 = arith.constant 0 : i32
    %c0_i32_1 = arith.constant 0 : i32
    %c0_i32_2 = arith.constant 0 : i32
    return %c0_i32, %c0_i32_0, %c0_i32_1 : i32, i32, i32
  }
  func.func @transform_2(%arg0: i32, %arg1: i32) -> (i32, i32, i32) {
    %c0_i32 = arith.constant 0 : i32
    %c0_i32_0 = arith.constant 0 : i32
    %c0_i32_1 = arith.constant 0 : i32
    %c0_i32_2 = arith.constant 0 : i32
    return %c0_i32, %c0_i32_0, %c0_i32_1 : i32, i32, i32
  }
  func.func @transform_3(%arg0: i32, %arg1: i32) -> (i32, i32, i32) {
    %c0_i32 = arith.constant 0 : i32
    %c0_i32_0 = arith.constant 0 : i32
    return %arg0, %c0_i32, %arg1 : i32, i32, i32
  }
}

</mosaic_0001>

<llo_original>
// kernel: block_forward.1
$region0: #{block_forward.1}
  #allocation0 [shape = 'u32[]', space=smem, size = 0x4, offset = 0x4, fixed_abs, tag = 'smem constant byte address 0x4 - core index']
  #allocation1 [shape = 'u32[72,128]{1,0:T(1,128)}', space=vmem, size = 0x9000, scoped, tag = 'internal scratch']
  %s0 = inlined_call_operand.vmem [shape: f32[2,4,256], index: 0, kind: input, shape index: {}, may-alias: {0,3}]
  %s1 = inlined_call_operand.vmem [shape: f32[1,4,128], index: 1, kind: input, shape index: {}]
  %s2 = inlined_call_operand.vmem [shape: f32[1,4,128], index: 2, kind: input, shape index: {}]
  %s3 = inlined_call_operand.vmem [shape: f32[2,4,256], index: 3, kind: output, shape index: {}, may-alias: {0,3}]
  %s4 = sld [smem:[#allocation0]]
  $region45: #{block_forward.1} parent=0
    _
  %s6 = ssub.s32 1, %s4
  %s7 = scalar_select 0, %s6, %s4
  loop: start=0, step=1, limit=4
  $region2: #{block_forward.1} parent=0 // loop_pre_header
    _
  $region3: #{block_forward.1} parent=0 // loop_header
    %s9 = sphi 0, %s13
    %p10 = scmp.ge.s32.totalorder %s9, 4
    %s16 = sphi 0, %s28
    %s17 = sphi 0, %s24
    %s18 = sphi 0, %s16
    %s19 = sphi 0, %s17
    %s20 = sphi 0, %s18
    %s21 = sphi 0, %s19
    %s33 = sphi 0, %s35
    %s36 = sphi 0, %s33
    %s37 = sphi 0, %s36
    %s53 = sphi 0, %s37
    %s57 = sphi 0, %s57
    %s59 = sphi 0, %s57
    %s60 = sphi 0, %s59
    %s74 = sphi 0, %s60
    %s78 = sphi 0, %s78
    %s80 = sphi 0, %s78
    %s81 = sphi 0, %s80
    %s95 = sphi 0, %s81
    %s103 = sphi 0, %s105
    %s106 = sphi 0, %s103
    %s107 = sphi 0, %s106
    %s123 = sphi 0, %s107
  $region4: #{block_forward.1} parent=0 // loop_header_branch
    %12 = sbr.rel (%p10) target = $region8
  $region5: #{block_forward.1} parent=0 // loop_body
    %s14 = ssub.s32 %s9, 1
    %s15 = ssub.s32 %s9, 2
    %s22 = sadd.s32 1, %s17
    %p23 = scmp.ge.s32.totalorder %s22, 1
    %s24 = scalar_select %p23, 0, %s22
    %s25 = sadd.s32 1, %s16
    %s26 = scalar_select %p23, %s25, %s16
    %p27 = scmp.ge.s32.totalorder %s26, 2
    %s28 = scalar_select %p27, 0, %s26
    %s29 = ssub.s32 %s16, %s28
    %s30 = ssub.s32 %s17, %s24
    %s31 = sor.u32 %s29, %s30
    %p32 = scmp.eq.s32.totalorder %s31, 0
    %s34 = sadd.s32 %s33, 1
    %s35 = scalar_select %p32, %s33, %s34
    %p38 = pneg %p32
    %p39 = scmp.eq.s32.totalorder %s9, 1
    %p40 = por %p38, %p39
    %p41 = scmp.ne.s32.totalorder %s33, %s36
    %p42 = scmp.eq.s32.totalorder %s9, 0
    %p43 = por %p41, %p42
    %p44 = scmp.ne.s32.totalorder %s33, %s36
    %p45 = scmp.eq.s32.totalorder %s14, 1
    %p46 = por %p44, %p45
    %p47 = scmp.ne.s32.totalorder %s36, %s37
    %p48 = scmp.eq.s32.totalorder %s14, 0
    %p49 = por %p47, %p48
    %p50 = scmp.ne.s32.totalorder %s36, %s37
    %p51 = scmp.eq.s32.totalorder %s15, 1
    %p52 = por %p50, %p51
    %p54 = scmp.ne.s32.totalorder %s37, %s53
    %p55 = scmp.eq.s32.totalorder %s15, 0
    %p56 = por %p54, %p55
    %s58 = sadd.s32 %s57, 1
    %p61 = scmp.eq.s32.totalorder %s9, 1
    %p62 = scmp.ne.s32.totalorder %s57, %s59
    %p63 = scmp.eq.s32.totalorder %s9, 0
    %p64 = por %p62, %p63
    %p65 = scmp.ne.s32.totalorder %s57, %s59
    %p66 = scmp.eq.s32.totalorder %s14, 1
    %p67 = por %p65, %p66
    %p68 = scmp.ne.s32.totalorder %s59, %s60
    %p69 = scmp.eq.s32.totalorder %s14, 0
    %p70 = por %p68, %p69
    %p71 = scmp.ne.s32.totalorder %s59, %s60
    %p72 = scmp.eq.s32.totalorder %s15, 1
    %p73 = por %p71, %p72
    %p75 = scmp.ne.s32.totalorder %s60, %s74
    %p76 = scmp.eq.s32.totalorder %s15, 0
    %p77 = por %p75, %p76
    %s79 = sadd.s32 %s78, 1
    %p82 = scmp.eq.s32.totalorder %s9, 1
    %p83 = scmp.ne.s32.totalorder %s78, %s80
    %p84 = scmp.eq.s32.totalorder %s9, 0
    %p85 = por %p83, %p84
    %p86 = scmp.ne.s32.totalorder %s78, %s80
    %p87 = scmp.eq.s32.totalorder %s14, 1
    %p88 = por %p86, %p87
    %p89 = scmp.ne.s32.totalorder %s80, %s81
    %p90 = scmp.eq.s32.totalorder %s14, 0
    %p91 = por %p89, %p90
    %p92 = scmp.ne.s32.totalorder %s80, %s81
    %p93 = scmp.eq.s32.totalorder %s15, 1
    %p94 = por %p92, %p93
    %p96 = scmp.ne.s32.totalorder %s81, %s95
    %p97 = scmp.eq.s32.totalorder %s15, 0
    %p98 = por %p96, %p97
    %s99 = ssub.s32 %s16, %s28
    %s100 = ssub.s32 %s17, %s24
    %s101 = sor.u32 %s99, %s100
    %p102 = scmp.eq.s32.totalorder %s101, 0
    %s104 = sadd.s32 %s103, 1
    %s105 = scalar_select %p102, %s103, %s104
    %p108 = pneg %p102
    %p109 = scmp.eq.s32.totalorder %s9, 1
    %p110 = por %p108, %p109
    %p111 = scmp.ne.s32.totalorder %s103, %s106
    %p112 = scmp.eq.s32.totalorder %s9, 0
    %p113 = por %p111, %p112
    %p114 = scmp.ne.s32.totalorder %s103, %s106
    %p115 = scmp.eq.s32.totalorder %s14, 1
    %p116 = por %p114, %p115
    %p117 = scmp.ne.s32.totalorder %s106, %s107
    %p118 = scmp.eq.s32.totalorder %s14, 0
    %p119 = por %p117, %p118
    %p120 = scmp.ne.s32.totalorder %s106, %s107
    %p121 = scmp.eq.s32.totalorder %s15, 1
    %p122 = por %p120, %p121
    %p124 = scmp.ne.s32.totalorder %s107, %s123
    %p125 = scmp.eq.s32.totalorder %s15, 0
    %p126 = por %p124, %p125
    %p127 = scmp.le.s32.totalorder 1, %s9
    %p128 = scmp.lt.s32.totalorder %s9, 3
    %p129 = pnand %p127, %p128
    %p130 = pneg %p129
    // Predicated region
    $region9: #{block_forward.1} parent=5 // pred_check
      _
    $region10: #{block_forward.1} parent=5 // pred_check_branch
      %132 = sbr.rel (%p129) target = $region12
    $region11: #{block_forward.1} parent=5 // pred_region
      %s133 = ssub.s32 %s9, 1
      // Predicated region
      $region13: #{block_forward.1} parent=11 // pred_check
        %p134 = pneg %p70
      $region14: #{block_forward.1} parent=11 // pred_check_branch
        %136 = sbr.rel (%p134) target = $region16
      $region15: #{block_forward.1} parent=11 // pred_region
        _
      $region16: #{block_forward.1} parent=11 // pred_fallthru
        _
      // Predicated region
      $region17: #{block_forward.1} parent=11 // pred_check
        %p137 = pneg %p91
      $region18: #{block_forward.1} parent=11 // pred_check_branch
        %139 = sbr.rel (%p137) target = $region20
      $region19: #{block_forward.1} parent=11 // pred_region
        _
      $region20: #{block_forward.1} parent=11 // pred_fallthru
        _
    $region12: #{block_forward.1} parent=5 // pred_fallthru
      _
    %p140 = scmp.lt.s32.totalorder %s9, 2
    // Predicated region
    $region21: #{block_forward.1} parent=5 // pred_check
      %p141 = pneg %p140
    $region22: #{block_forward.1} parent=5 // pred_check_branch
      %143 = sbr.rel (%p141) target = $region24
    $region23: #{block_forward.1} parent=5 // pred_region
      // Predicated region
      $region25: #{block_forward.1} parent=23 // pred_check
        %p144 = pneg %p43
      $region26: #{block_forward.1} parent=23 // pred_check_branch
        %146 = sbr.rel (%p144) target = $region28
      $region27: #{block_forward.1} parent=23 // pred_region
        %s147 = smul.u32 2, %s17
        %p148 = scmp.lt.s32.totalorder %s16, 1
        %s149 = scalar_select %p148, %s16, 1
        %p150 = scmp.lt.s32.totalorder %s147, 1
        %s151 = scalar_select %p150, %s147, 1
        %s152 = smul.addr %s149, 2
        %s153 = sadd.s32 %s151, %s152
        %s154 = smul.addr %s153, 4
        %s155 = scalar_lea.vmem %s0, %s154
        %s156 = smul.u32 2, %s17
      $region28: #{block_forward.1} parent=23 // pred_fallthru
        _
    $region24: #{block_forward.1} parent=5 // pred_fallthru
      _
    %p157 = scmp.le.s32.totalorder 1, %s9
    %p158 = scmp.lt.s32.totalorder %s9, 3
    %p159 = pnand %p157, %p158
    %p160 = pneg %p159
    // Predicated region
    $region29: #{block_forward.1} parent=5 // pred_check
      _
    $region30: #{block_forward.1} parent=5 // pred_check_branch
      %162 = sbr.rel (%p159) target = $region32
    $region31: #{block_forward.1} parent=5 // pred_region
      %s163 = ssub.s32 %s9, 1
      %s164 = smul.u32 2, %s19
      %p165 = scmp.lt.s32.totalorder %s18, 1
      %s166 = scalar_select %p165, %s18, 1
      %p167 = scmp.lt.s32.totalorder %s164, 1
      %s168 = scalar_select %p167, %s164, 1
      %s169 = smul.addr %s166, 2
      %s170 = sadd.s32 %s168, %s169
      %s171 = smul.addr %s170, 4
      %s172 = scalar_lea.vmem %s0, %s171
      %p173 = pneg %p49
      %p174 = pneg %p46
      %p175 = pneg %p70
      %p176 = pneg %p67
      %p177 = pneg %p91
      %p178 = pneg %p88
      %p179 = pneg %p119
      %p180 = pneg %p116
      %s181 = smul.u32 2, %s19
      %p182 = scmp.lt.s32.totalorder %s18, 1
      %s183 = scalar_select %p182, %s18, 1
      %p184 = scmp.lt.s32.totalorder %s181, 1
      %s185 = scalar_select %p184, %s181, 1
      %s186 = smul.addr %s183, 2
      %s187 = sadd.s32 %s185, %s186
      %s188 = smul.addr %s187, 4
      %s189 = scalar_lea.vmem %s3, %s188
      %s190 = smul.u32 2, %s19
      %p191 = scmp.lt.s32.totalorder %s18, 1
      %s192 = scalar_select %p191, %s18, 1
      %p193 = scmp.lt.s32.totalorder %s190, 1
      %s194 = scalar_select %p193, %s190, 1
      %s195 = smul.addr %s192, 2
      %s196 = sadd.s32 %s194, %s195
      %s197 = smul.addr %s196, 4
      %s198 = scalar_lea.vmem %s0, %s197
      %s199 = smul.u32 2, %s19
      %s200 = smul.u32 2, %s19
      %p201 = scmp.lt.s32.totalorder %s18, 1
      %s202 = scalar_select %p201, %s18, 1
      %p203 = scmp.lt.s32.totalorder %s200, 1
      %s204 = scalar_select %p203, %s200, 1
      %s205 = smul.addr %s202, 2
      %s206 = sadd.s32 %s204, %s205
      %s207 = smul.addr %s206, 4
      %s208 = scalar_lea.vmem %s3, %s207
      %s209 = smul.u32 2, %s19
      %v210 = vld [vmem:[%s1] sm:$0xf]
      %v211 = vld [vmem:[%s2] sm:$0xf]
      %v212 = vld [vmem:[%s198] sm:$0xff]
      %214 = vset.pattern.permute.xlu0 0
      %215 = vperm.xlu0 %214, %v210
      %v216 = vpop.permute.xlu0 %215
      %v218 = vunpack.c.l.s4 839922192
      %v219 = vunpack.c.0.s8 %v218
      %v220 = vperm.slane %v216, %v219
      %v222 = vadd.f32 %v212, %v220
      %v223 = vmul.f32 %v222, %v222
      %225 = vst [vmem:[#allocation1] ss:$2 sm:$0xff] %v223
      %v226 = vld.sshfl [vmem:[#allocation1] sm:$0xff pattern:$0x75316420]
      %v227 = vld.sshfl [vmem:[#allocation1 + $0x8] sm:$0xff pattern:$0x75316420]
      %vm230 = vcmask 1043456
      %v231 = vsel %vm230, %v226, 0.0
      %v232 = vrot.slane %v231, 4
      %v233 = vadd.f32 %v231, %v232
      %v234 = vrot.slane %v233, 2
      %v235 = vadd.f32 %v233, %v234
      %v236 = vrot.slane %v235, 1
      %v237 = vadd.f32 %v235, %v236
      %v238 = vsel %vm230, %v227, 0.0
      %v239 = vrot.slane %v238, 4
      %v240 = vadd.f32 %v238, %v239
      %v241 = vrot.slane %v240, 2
      %v242 = vadd.f32 %v240, %v241
      %v243 = vrot.slane %v242, 1
      %v244 = vadd.f32 %v242, %v243
      %v245 = vmax.f32 %v237, 1e-24
      %v246 = vmax.f32 %v244, 1e-24
      %v247 = vrsqrt.pop %v245
      %v248 = vmul.f32 %v247, %v245
      %v249 = vmul.f32 %v248, %v247
      %v250 = vmul.f32 0.5, %v249
      %v251 = vsub.f32 1.5, %v250
      %v252 = vmul.f32 %v247, %v251
      %vm253 = vweird.f32 %v245
      %vm254 = vweird.f32 %v247
      %vm255 = vmor %vm253, %vm254
      %v256 = vsel %vm255, %v247, %v252
      %v257 = vrsqrt.pop %v246
      %v258 = vmul.f32 %v257, %v246
      %v259 = vmul.f32 %v258, %v257
      %v260 = vmul.f32 0.5, %v259
      %v261 = vsub.f32 1.5, %v260
      %v262 = vmul.f32 %v257, %v261
      %vm263 = vweird.f32 %v246
      %vm264 = vweird.f32 %v257
      %vm265 = vmor %vm263, %vm264
      %v266 = vsel %vm265, %v257, %v262
      %v269 = vrot.slane %v266, 4
      %v270 = vsel %vm230, %v256, %v269
      %v272 = vmul.f32 %v222, %v270
      %274 = vset.pattern.permute.xlu0 0
      %275 = vperm.xlu0 %274, %v211
      %v276 = vpop.permute.xlu0 %275
      %v278 = vunpack.c.l.s4 839922192
      %v279 = vunpack.c.0.s8 %v278
      %v280 = vperm.slane %v276, %v279
      %v282 = vmul.f32 %v272, %v280
      %v283 = vsub.f32 0.0, %v282
      %v284 = vmul.f32 %v283, 1.442695
      %v285 = vpow.pop %v284
      %v286 = vadd.f32 %v285, 1.0
      %v287 = vrcp.pop %v286
      %v288 = vmul.f32 %v282, %v287
      %289 = vst [vmem:[%s208] sm:$0xff] %v288
      %s290 = smul.u32 2, %s19
      %p291 = scmp.lt.s32.totalorder %s18, 1
      %s292 = scalar_select %p291, %s18, 1
      %p293 = scmp.lt.s32.totalorder %s290, 1
      %s294 = scalar_select %p293, %s290, 1
      %s295 = smul.addr %s292, 2
      %s296 = sadd.s32 %s294, %s295
      %s297 = smul.addr %s296, 4
      %s298 = scalar_lea.vmem %s3, %s297
      // Predicated region
      $region33: #{block_forward.1} parent=31 // pred_check
        %p299 = pneg %p116
      $region34: #{block_forward.1} parent=31 // pred_check_branch
        %301 = sbr.rel (%p299) target = $region36
      $region35: #{block_forward.1} parent=31 // pred_region
        %s302 = smul.u32 2, %s19
      $region36: #{block_forward.1} parent=31 // pred_fallthru
        _
    $region32: #{block_forward.1} parent=5 // pred_fallthru
      _
    %p303 = scmp.le.s32.totalorder 2, %s9
    // Predicated region
    $region37: #{block_forward.1} parent=5 // pred_check
      %p304 = pneg %p303
    $region38: #{block_forward.1} parent=5 // pred_check_branch
      %306 = sbr.rel (%p304) target = $region40
    $region39: #{block_forward.1} parent=5 // pred_region
      %s307 = ssub.s32 %s9, 2
      // Predicated region
      $region41: #{block_forward.1} parent=39 // pred_check
        %p308 = pneg %p122
      $region42: #{block_forward.1} parent=39 // pred_check_branch
        %310 = sbr.rel (%p308) target = $region44
      $region43: #{block_forward.1} parent=39 // pred_region
        %s311 = smul.u32 2, %s21
        %p312 = scmp.lt.s32.totalorder %s20, 1
        %s313 = scalar_select %p312, %s20, 1
        %p314 = scmp.lt.s32.totalorder %s311, 1
        %s315 = scalar_select %p314, %s311, 1
        %s316 = smul.addr %s313, 2
        %s317 = sadd.s32 %s315, %s316
        %s318 = smul.addr %s317, 4
        %s319 = scalar_lea.vmem %s3, %s318
      $region44: #{block_forward.1} parent=39 // pred_fallthru
        _
    $region40: #{block_forward.1} parent=5 // pred_fallthru
      _
  $region6: #{block_forward.1} parent=0 // loop_footer
    %s13 = sadd.s32 1, %s9
  $region7: #{block_forward.1} parent=0 // loop_footer_branch
    %8 = sbr.rel target = $region3
  $region8: #{block_forward.1} parent=0 // loop_exit
    _

</llo_original>
